<compile_context>
chip_gen: v7x
topology: tpu7x:2x2x1
jax: 0.10.0
libtpu: 0.0.40
codegen_flags: <defaults>
</compile_context>

<pallas_src>
import jax
import jax.numpy as jnp
from jax.experimental import pallas as pl
from jax.experimental.pallas import tpu as pltpu


def fm2_linear_kernel(x_ref, w_ref, o_ref):
    # x_ref : (TB, F, D)   w_ref : (F, D)   o_ref : (TB, F)
    x = x_ref[...].astype(jnp.float32)
    w = w_ref[...].astype(jnp.float32)
    # Broadcast weight over the batch tile, multiply on the VPU, reduce over D
    # (the 128-lane axis) with f32 accumulation; cast only at the store.
    o_ref[...] = jnp.sum(x * w[None, :, :], axis=-1).astype(o_ref.dtype)


def _pick_batch_tile(B, F, D, itemsize, vmem_tile_budget_bytes):
    """Largest batch tile whose double-buffered VMEM footprint fits the budget."""
    # Resident weight (worst case double-buffered) ...
    fixed = 2 * F * D * itemsize
    # ... plus per batch-row: 2x x tile (double buffer) + f32 temp + 2x out tile.
    per_row = 2 * F * D * itemsize + F * D * 4 + 2 * F * itemsize
    tb = max(1, (vmem_tile_budget_bytes - fixed) // per_row)
    if tb >= B:
        return B  # single block: block dim == full array dim is always legal
    # TB < B: second-to-last dim of the (TB, F) output block must be
    # sublane-aligned; a multiple of 32 is safe for f32/bf16/int8 packing.
    tb = max(8, (tb // 32) * 32)
    return min(tb, B)


def fm2_linear_transform(
    input_feature: jax.Array,
    weight: jax.Array,
    *,
    force_pallas: bool = False,
    vmem_tile_budget_bytes: int = 12 * 1024 * 1024,
) -> jax.Array:
    """Pallas equivalent of FM2LinearTransform.forward.

    input_feature : (B, F, D)
    weight        : (F, D)   (self.matrix, or the optional inputWeight)
    returns       : squeeze of (B, F)
    """
    B, F, D = input_feature.shape
    assert weight.shape == (F, D)
    itemsize = jnp.dtype(input_feature.dtype).itemsize
    total_bytes = B * F * D * itemsize

    # Tiny problems: pallas_call fixed overhead dwarfs the useful memory
    # traffic; let XLA fuse an einsum instead.
    if not force_pallas and total_bytes < (2 << 20):
        out = jnp.einsum(
            "bfd,fd->bf",
            input_feature.astype(jnp.float32),
            weight.astype(jnp.float32),
        ).astype(input_feature.dtype)
        return jnp.squeeze(out)

    tb = _pick_batch_tile(B, F, D, itemsize, vmem_tile_budget_bytes)
    grid = (pl.cdiv(B, tb),)

    out = pl.pallas_call(
        fm2_linear_kernel,
        out_shape=jax.ShapeDtypeStruct((B, F), input_feature.dtype),
        grid_spec=pltpu.PrefetchScalarGridSpec(
            num_scalar_prefetch=0,
            grid=grid,
            in_specs=[
                # x streams through VMEM, batch-tiled (auto double-buffered).
                pl.BlockSpec((tb, F, D), lambda b: (b, 0, 0)),
                # weight: constant block index -> stays resident, no re-DMA.
                pl.BlockSpec((F, D), lambda b: (0, 0)),
            ],
            out_specs=pl.BlockSpec((tb, F), lambda b: (b, 0)),
        ),
        compiler_params=pltpu.CompilerParams(
            # Batch axis is embarrassingly parallel -> split across the two
            # TensorCores on v7x; harmless on v5e/v6e (single TC).
            dimension_semantics=("parallel",),
            # Explicit scoped-VMEM limit: safe on every generation
            # (v5e default 16 MiB, v6e/v7x default 32 MiB, v7x physical 64 MiB).
            vmem_limit_bytes=32 * 1024 * 1024,
        ),
    )(input_feature, weight)

    # Match torch's .squeeze() on the (B, F, 1, 1) matmul result.
    return jnp.squeeze(out)


if __name__ == "__main__":
    key = jax.random.PRNGKey(0)
    k_x, k_w, k_x2, k_w2 = jax.random.split(key, 4)

    # --- 1) Small shapes consistent with the module (forced Pallas path) ---
    B, featureNumb, dim = 2, 8, 32
    x = jax.random.normal(k_x, (B, featureNumb, dim), dtype=jnp.float32)
    matrix = 0.01 * jax.random.normal(k_w, (featureNumb, dim), dtype=jnp.float32)

    out_small = jax.block_until_ready(
        fm2_linear_transform(x, matrix, force_pallas=True)
    )
    ref_small = jnp.squeeze(jnp.einsum("bfd,fd->bf", x, matrix))
    assert out_small.shape == ref_small.shape == (B, featureNumb)
    assert jnp.allclose(out_small, ref_small, atol=1e-5, rtol=1e-5)

    # --- 2) Larger batch with a deliberately small VMEM budget so the
    #        grid has many steps and a partial trailing block (masked writes). ---
    B2, F2, D2 = 500, 16, 64
    x2 = jax.random.normal(k_x2, (B2, F2, D2), dtype=jnp.float32)
    matrix2 = 0.01 * jax.random.normal(k_w2, (F2, D2), dtype=jnp.float32)

    out_big = jax.block_until_ready(
        fm2_linear_transform(
            x2, matrix2, force_pallas=True, vmem_tile_budget_bytes=512 * 1024
        )
    )
    ref_big = jnp.einsum("bfd,fd->bf", x2, matrix2)
    assert out_big.shape == (B2, F2)
    assert jnp.allclose(out_big, ref_big, atol=1e-4, rtol=1e-4)

    # --- 3) Default dispatch: tiny input takes the fused-einsum fast path. ---
    out_dispatch = jax.block_until_ready(fm2_linear_transform(x, matrix))
    assert jnp.allclose(out_dispatch, ref_small, atol=1e-5, rtol=1e-5)

    print("KERNEL_OK")
</pallas_src>

<mosaic_0001>
module attributes {stable_mosaic.version = 11 : i64} {
  func.func @fm2_linear_kernel(%arg0: i32, %arg1: memref<2x8x32xf32, #tpu.memory_space<vmem>>, %arg2: memref<8x32xf32, #tpu.memory_space<vmem>>, %arg3: memref<2x8xf32, #tpu.memory_space<vmem>>) attributes {dimension_semantics = [#tpu.dimension_semantics<parallel>], iteration_bounds = array<i64: 1>, scalar_prefetch = 0 : i64, scratch_operands = 0 : i64, tpu.core_type = #tpu.core_type<tc>, window_params = [{transform_indices = @transform_0, window_bounds = array<i64: 2, 8, 32>}, {pipeline_mode = #tpu.pipeline_mode<synchronous>, transform_indices = @transform_1, window_bounds = array<i64: 8, 32>}, {transform_indices = @transform_2, window_bounds = array<i64: 2, 8>}]} {
    %c0 = arith.constant 0 : index
    %c0_0 = arith.constant 0 : index
    %c0_1 = arith.constant 0 : index
    %0 = vector.load %arg1[%c0, %c0_0, %c0_1] : memref<2x8x32xf32, #tpu.memory_space<vmem>>, vector<2x8x32xf32>
    %c0_2 = arith.constant 0 : index
    %c0_3 = arith.constant 0 : index
    %1 = vector.load %arg2[%c0_2, %c0_3] : memref<8x32xf32, #tpu.memory_space<vmem>>, vector<8x32xf32>
    %2 = vector.shape_cast %1 : vector<8x32xf32> to vector<1x8x32xf32>
    %3 = vector.broadcast %2 : vector<1x8x32xf32> to vector<2x8x32xf32>
    %4 = arith.mulf %0, %3 : vector<2x8x32xf32>
    %cst = arith.constant dense<0.000000e+00> : vector<2x8xf32>
    %5 = vector.multi_reduction <add>, %4, %cst [2] : vector<2x8x32xf32> to vector<2x8xf32>
    %c0_4 = arith.constant 0 : index
    %c0_5 = arith.constant 0 : index
    %6 = vector.load %arg3[%c0_4, %c0_5] : memref<2x8xf32, #tpu.memory_space<vmem>>, vector<2x8xf32>
    tpu.vector_store %arg3[%c0_4, %c0_5], %5 {strides = array<i32>} : memref<2x8xf32, #tpu.memory_space<vmem>>, vector<2x8xf32>,
    return
  }
  func.func @transform_0(%arg0: i32) -> (i32, i32, i32) {
    %c0_i32 = arith.constant 0 : i32
    %c0_i32_0 = arith.constant 0 : i32
    %c0_i32_1 = arith.constant 0 : i32
    return %arg0, %c0_i32, %c0_i32_0 : i32, i32, i32
  }
  func.func @transform_1(%arg0: i32) -> (i32, i32) {
    %c0_i32 = arith.constant 0 : i32
    %c0_i32_0 = arith.constant 0 : i32
    %c0_i32_1 = arith.constant 0 : i32
    return %c0_i32, %c0_i32_0 : i32, i32
  }
  func.func @transform_2(%arg0: i32) -> (i32, i32) {
    %c0_i32 = arith.constant 0 : i32
    %c0_i32_0 = arith.constant 0 : i32
    return %arg0, %c0_i32 : i32, i32
  }
}

</mosaic_0001>

<llo_original>
// kernel: tpu_custom_call.1
$region0: #{tpu_custom_call.1}
  #allocation0 [shape = 'u32[]', space=smem, size = 0x4, offset = 0x4, fixed_abs, tag = 'smem constant byte address 0x4 - core index']
  #allocation1 [shape = 'u32[144,128]{1,0:T(1,128)}', space=vmem, size = 0x12000, scoped, tag = 'internal scratch']
  %s0 = inlined_call_operand.hbm [shape: f32[2,8,32], index: 0, kind: input, shape index: {}]
  %s1 = inlined_call_operand.hbm [shape: f32[8,32], index: 1, kind: input, shape index: {}]
  %s2 = inlined_call_operand.hbm [shape: f32[2,8], index: 2, kind: output, shape index: {}]
  %s3 = sld [smem:[#allocation0]]
  $region26: #{tpu_custom_call.1} parent=0
    _
  %s5 = ssub.s32 1, %s3
  %s6 = scalar_select 0, %s5, %s3
  $region1: #{tpu_custom_call.1} parent=0
    #allocation2 [shape = 'u8[8192]{0}', space=vmem, size = 0x2000, scoped, tag = 'input window, operand 0, single buffered']
    #allocation3 [shape = 's32[1]{0}', space=sflag, size = 0x4, scoped, tag = 'scoped memory for tpu_custom_call.1']
    #allocation4 [shape = 's32[1]{0}', space=sflag, size = 0x4, scoped, tag = 'scoped memory for tpu_custom_call.1']
    #allocation5 [shape = 'u8[4096]{0}', space=vmem, size = 0x1000, scoped, tag = 'input window, operand 1, single buffered']
    #allocation6 [shape = 's32[1]{0}', space=sflag, size = 0x4, scoped, tag = 'scoped memory for tpu_custom_call.1']
    #allocation7 [shape = 'u8[1024]{0}', space=vmem, size = 0x400, scoped, tag = 'output window, operand 0, single buffered']
    %7 = vsyncpa [#allocation3], 0
    %8 = vsyncpa [#allocation6], 0
    %9 = vsyncpa [#allocation4], 0
    // Predicated region
    $region2: #{tpu_custom_call.1} parent=1 // pred_check
      _
    $region3: #{tpu_custom_call.1} parent=1 // pred_check_branch
      %11 = sbr.rel (0) target = $region5
    $region4: #{tpu_custom_call.1} parent=1 // pred_region
      %s13 = ssub.s32 256, 256
      %14 = vsyncadd [#allocation3], %s13
      %s15 = sshll.u32 [#allocation2], 4
      %s16 = int_to_ptr.vmem [resolvable:$true] %s15
      %21 = dma.hbm_to_vmem [thread:$0]  %s0, 256, %s16, [#allocation3], 128, 128, 8
    $region5: #{tpu_custom_call.1} parent=1 // pred_fallthru
      _
    // Predicated region
    $region6: #{tpu_custom_call.1} parent=1 // pred_check
      _
    $region7: #{tpu_custom_call.1} parent=1 // pred_check_branch
      %23 = sbr.rel (0) target = $region9
    $region8: #{tpu_custom_call.1} parent=1 // pred_region
      %s25 = ssub.s32 128, 128
      %26 = vsyncadd [#allocation6], %s25
      %s28 = sshll.u32 [#allocation5], 4
      %s29 = int_to_ptr.vmem [resolvable:$true] %s28
      %31 = dma.hbm_to_vmem [thread:$0]  %s1, 128, %s29, [#allocation6]
    $region9: #{tpu_custom_call.1} parent=1 // pred_fallthru
      _
    // Predicated region
    $region10: #{tpu_custom_call.1} parent=1 // pred_check
      _
    $region11: #{tpu_custom_call.1} parent=1 // pred_check_branch
      %33 = sbr.rel (0) target = $region13
    $region12: #{tpu_custom_call.1} parent=1 // pred_region
      %34 = dma.done [#allocation3], 256
    $region13: #{tpu_custom_call.1} parent=1 // pred_fallthru
      _
    // Predicated region
    $region14: #{tpu_custom_call.1} parent=1 // pred_check
      _
    $region15: #{tpu_custom_call.1} parent=1 // pred_check_branch
      %36 = sbr.rel (0) target = $region17
    $region16: #{tpu_custom_call.1} parent=1 // pred_region
      %37 = dma.done [#allocation6], 128
    $region17: #{tpu_custom_call.1} parent=1 // pred_fallthru
      _
    %v38 = vld [vmem:[#allocation2] sm:$0xff]
    %v39 = vld [vmem:[#allocation2 + $0x8] sm:$0xff]
    %v40 = vld [vmem:[#allocation5] sm:$0xff]
    %v41 = vmul.f32 %v38, %v40
    %v42 = vmul.f32 %v39, %v40
    %vm43 = vcmask 261120
    %v44 = vsel %vm43, %v41, 0.0
    %45 = vadd.xlane.f32.xlu0 %v44
    %v46 = vpop.xlane.xlu0 %45
    %v47 = vsel %vm43, %v42, 0.0
    %48 = vadd.xlane.f32.xlu0 %v47
    %v49 = vpop.xlane.xlu0 %48
    %v52 = vlaneseq
    %v53 = vand.u32 %v52, 127
    %v54 = vlaneseq
    %v55 = vshrl.u32 %v54, 7
    %v56 = vsub.s32 %v53, %v55
    %v57 = vrot.slane %v46, %v56
    %v58 = vlaneseq
    %v59 = vshrl.u32 %v58, 7
    %v60 = vsub.s32 %v53, %v59
    %v61 = vrot.slane %v49, %v60
    %vm62 = vcmask 1041409
    %v63 = vsel %vm62, %v61, %v57
    %vm65 = vcmask 58368
    %66 = vst.msk [vmem:[#allocation7] sm:$0x3] %vm65, %v63
    // Predicated region
    $region18: #{tpu_custom_call.1} parent=1 // pred_check
      _
    $region19: #{tpu_custom_call.1} parent=1 // pred_check_branch
      %68 = sbr.rel (0) target = $region21
    $region20: #{tpu_custom_call.1} parent=1 // pred_region
      %s70 = ssub.s32 32, 32
      %71 = vsyncadd [#allocation4], %s70
      %s73 = sshll.u32 [#allocation7], 4
      %s74 = int_to_ptr.vmem [resolvable:$true] %s73
      %76 = dma.vmem_to_hbm [thread:$0]  %s74, 32, %s2, [#allocation4]
    $region21: #{tpu_custom_call.1} parent=1 // pred_fallthru
      _
    // Predicated region
    $region22: #{tpu_custom_call.1} parent=1 // pred_check
      _
    $region23: #{tpu_custom_call.1} parent=1 // pred_check_branch
      %78 = sbr.rel (0) target = $region25
    $region24: #{tpu_custom_call.1} parent=1 // pred_region
      %79 = dma.done [#allocation4], 32
    $region25: #{tpu_custom_call.1} parent=1 // pred_fallthru
      _
    %80 = vsyncpa [#allocation3], 1
    %81 = vsyncpa [#allocation6], 1
    %82 = vsyncpa [#allocation4], 1

</llo_original>
